<compile_context>
chip_gen: v5e
topology: v5e:2x2
jax: 0.10.0
libtpu: 0.0.40
codegen_flags: <defaults>
</compile_context>

<pallas_src>
import jax
import jax.numpy as jnp
from jax import lax
from jax.experimental import pallas as pl
from jax.experimental.pallas import tpu as pltpu


def _round_up(x: int, m: int) -> int:
    return ((x + m - 1) // m) * m


def _pad2(x, rows: int, cols: int):
    return jnp.pad(x, ((0, rows - x.shape[0]), (0, cols - x.shape[1])))


def _vmem_budget_bytes():
    """Generation-aware VMEM budget (e.g. ~48 MiB on v7x, ~96 MiB on v5e/v6e)."""
    try:
        cap = pltpu.get_tpu_info().vmem_capacity_bytes
    except Exception:
        cap = 64 * 1024 * 1024
    return min(100 * 1024 * 1024, (cap * 3) // 4), cap


def _make_labels_kernel(inv_t, scale, n_anchor, n_contrast, tm, tk):
    """Fast path: positive mask built in-kernel from int32 class ids."""

    def kernel(a_cls_ref, c_cls_ref, a_ref, c_ref, loss_ref,
               m_sc, l_sc, num_sc, cnt_sc):
        i = pl.program_id(0)
        k = pl.program_id(1)

        @pl.when(k == 0)
        def _():
            m_sc[...] = jnp.full_like(m_sc, -jnp.inf)
            l_sc[...] = jnp.zeros_like(l_sc)
            num_sc[...] = jnp.zeros_like(num_sc)
            cnt_sc[...] = jnp.zeros_like(cnt_sc)

        # s[j, i] = <contrast_j, anchor_i> / T  (MXU, f32 accumulation, trans_b).
        s = lax.dot_general(c_ref[...], a_ref[...], (((1,), (1,)), ((), ())),
                            preferred_element_type=jnp.float32) * inv_t

        # Small iotas; the compares broadcast to [TK, TM].
        c_idx = k * tk + lax.broadcasted_iota(jnp.int32, (tk, 1), 0)
        a_idx = i * tm + lax.broadcasted_iota(jnp.int32, (1, tm), 1)
        c_valid = c_idx < n_contrast                       # padded contrast rows
        keep = jnp.logical_and(c_valid, c_idx != a_idx)    # logits_mask

        # Online softmax over the contrast (row) axis.  Padded rows (zero
        # features -> s == 0) may raise the running max; the shift cancels
        # exactly in num - cnt*(m + log(l)), so this is safe.  c_valid stays
        # inside `keep` so padded rows never enter the denominator.
        bm = jnp.max(s, axis=0, keepdims=True)
        m_new = jnp.maximum(m_sc[...], bm)
        alpha = jnp.exp(m_sc[...] - m_new)
        p = jnp.where(keep, jnp.exp(s - m_new), 0.0)
        l_sc[...] = alpha * l_sc[...] + jnp.sum(p, axis=0, keepdims=True)
        m_sc[...] = m_new

        pos = jnp.logical_and(keep, c_cls_ref[...] == a_cls_ref[...])
        num_sc[...] += jnp.sum(jnp.where(pos, s, 0.0), axis=0, keepdims=True)
        cnt_sc[...] += jnp.sum(pos.astype(jnp.float32), axis=0, keepdims=True)

        @pl.when(k == pl.num_programs(1) - 1)
        def _():
            lse = m_sc[...] + jnp.log(l_sc[...])
            cnt = cnt_sc[...]
            loss = (-scale) * (num_sc[...] - cnt * lse) / cnt
            # Zero padded anchor lanes so no spurious NaNs leave the kernel.
            loss_ref[...] = jnp.where(a_idx < n_anchor, loss, 0.0)

    return kernel


def _make_dense_mask_kernel(inv_t, scale, n_anchor, n_contrast, tm, tk):
    """Fallback for an explicit (possibly asymmetric / weighted) bsz x bsz mask."""

    def kernel(mask_ref, a_ref, c_ref, loss_ref, m_sc, l_sc, num_sc, den_sc):
        i = pl.program_id(0)
        k = pl.program_id(1)

        @pl.when(k == 0)
        def _():
            m_sc[...] = jnp.full_like(m_sc, -jnp.inf)
            l_sc[...] = jnp.zeros_like(l_sc)
            num_sc[...] = jnp.zeros_like(num_sc)
            den_sc[...] = jnp.zeros_like(den_sc)

        s = lax.dot_general(c_ref[...], a_ref[...], (((1,), (1,)), ((), ())),
                            preferred_element_type=jnp.float32) * inv_t

        c_idx = k * tk + lax.broadcasted_iota(jnp.int32, (tk, 1), 0)
        a_idx = i * tm + lax.broadcasted_iota(jnp.int32, (1, tm), 1)
        c_valid = c_idx < n_contrast
        keep = jnp.logical_and(c_valid, c_idx != a_idx)

        bm = jnp.max(s, axis=0, keepdims=True)
        m_new = jnp.maximum(m_sc[...], bm)
        alpha = jnp.exp(m_sc[...] - m_new)
        p = jnp.where(keep, jnp.exp(s - m_new), 0.0)
        l_sc[...] = alpha * l_sc[...] + jnp.sum(p, axis=0, keepdims=True)
        m_sc[...] = m_new

        w = jnp.where(keep, mask_ref[...].astype(jnp.float32), 0.0)
        num_sc[...] += jnp.sum(w * s, axis=0, keepdims=True)
        den_sc[...] += jnp.sum(w, axis=0, keepdims=True)

        @pl.when(k == pl.num_programs(1) - 1)
        def _():
            lse = m_sc[...] + jnp.log(l_sc[...])
            den = den_sc[...]
            loss = (-scale) * (num_sc[...] - den * lse) / den
            loss_ref[...] = jnp.where(a_idx < n_anchor, loss, 0.0)

    return kernel


def supcon_loss(
    features,
    labels=None,
    mask=None,
    weights=None,
    temperature: float = 0.07,
    contrast_mode: str = "all",
    base_temperature: float = 0.07,
    feature_dtype=None,          # e.g. jnp.bfloat16 for the bf16 MXU path
    tm_max: int = None,          # anchor tile (auto: 256, or 512 on 128MiB parts)
    tk_max: int = 512,           # contrast block (streamed, double-buffered)
):
    """JAX/Pallas port of SupConLoss.forward (contrast_mode 'all' or 'one')."""
    if features.ndim < 3:
        raise ValueError("`features` needs to be [bsz, n_views, ...]")
    if features.ndim > 3:
        features = features.reshape(features.shape[0], features.shape[1], -1)
    if labels is not None and mask is not None:
        raise ValueError("Cannot define both `labels` and `mask`")

    bsz, n_views, dim = features.shape
    contrast_count = n_views
    # torch.cat(torch.unbind(features, dim=1), dim=0): view-major concat.
    contrast_feature = jnp.swapaxes(features, 0, 1).reshape(n_views * bsz, dim)

    if contrast_mode == "one":
        anchor_feature = features[:, 0, :]
        anchor_count = 1
    elif contrast_mode == "all":
        anchor_feature = contrast_feature
        anchor_count = contrast_count
    else:
        raise ValueError(f"Unknown mode: {contrast_mode}")

    n_anchor = anchor_count * bsz
    n_contrast = contrast_count * bsz

    if feature_dtype is not None:
        anchor_feature = anchor_feature.astype(feature_dtype)
        contrast_feature = contrast_feature.astype(feature_dtype)

    # Geometry (generation-aware).
    vmem_limit, vmem_cap = _vmem_budget_bytes()
    if tm_max is None:
        tm_max = 512 if vmem_cap >= 96 * 1024 * 1024 else 256

    tm = min(tm_max, _round_up(n_anchor, 128))
    if _round_up(n_anchor, tm) == tm and tm > 128:
        # Single anchor tile -> split so v7x's second TensorCore gets work.
        tm = _round_up((n_anchor + 1) // 2, 128)
    n_a_pad = _round_up(n_anchor, tm)

    tk = min(tk_max, _round_up(n_contrast, 128))
    n_c_pad = _round_up(n_contrast, tk)
    d_pad = _round_up(dim, 128)

    if contrast_mode == "all":
        # Anchor == contrast features: pad once, feed the same array twice.
        feat = _pad2(contrast_feature, max(n_a_pad, n_c_pad), d_pad)
        a_arr, c_arr = feat, feat
    else:
        a_arr = _pad2(anchor_feature, n_a_pad, d_pad)
        c_arr = _pad2(contrast_feature, n_c_pad, d_pad)

    grid = (n_a_pad // tm, n_c_pad // tk)
    cparams = pltpu.CompilerParams(
        dimension_semantics=("parallel", "arbitrary"),
        vmem_limit_bytes=int(vmem_limit),
    )
    out_shape = jax.ShapeDtypeStruct((1, n_a_pad), jnp.float32)
    out_spec = pl.BlockSpec((1, tm), lambda i, k: (0, i))          # lane-dense
    a_spec = pl.BlockSpec((tm, d_pad), lambda i, k: (i, 0))
    c_spec = pl.BlockSpec((tk, d_pad), lambda i, k: (k, 0))        # streamed
    scratch = [pltpu.VMEM((1, tm), jnp.float32)] * 4

    inv_t = 1.0 / temperature
    scale = temperature / base_temperature

    if mask is None:
        # labels given, or SimCLR eye-mask (class id == sample index).
        if labels is not None:
            cls = jnp.asarray(labels).reshape(-1).astype(jnp.int32)
            if cls.shape[0] != bsz:
                raise ValueError("Num of labels does not match num of features")
        else:
            cls = jnp.arange(bsz, dtype=jnp.int32)
        a_cls = jnp.pad(jnp.tile(cls, anchor_count), (0, n_a_pad - n_anchor),
                        constant_values=-1).reshape(1, n_a_pad)
        c_cls = jnp.pad(jnp.tile(cls, contrast_count), (0, n_c_pad - n_contrast),
                        constant_values=-2).reshape(n_c_pad, 1)

        kernel = _make_labels_kernel(inv_t, scale, n_anchor, n_contrast, tm, tk)
        loss_rows = pl.pallas_call(
            kernel,
            out_shape=out_shape,
            grid_spec=pltpu.PrefetchScalarGridSpec(
                num_scalar_prefetch=0,
                grid=grid,
                in_specs=[
                    pl.BlockSpec((1, tm), lambda i, k: (0, i)),   # anchor class ids
                    pl.BlockSpec((tk, 1), lambda i, k: (k, 0)),   # contrast class ids
                    a_spec,
                    c_spec,
                ],
                out_specs=out_spec,
                scratch_shapes=scratch),
            compiler_params=cparams,
        )(a_cls, c_cls, a_arr, c_arr)
    else:
        # Explicit user-provided bsz x bsz mask (can be asymmetric / weighted).
        # Streamed in its given dtype (bool/int8/bf16/f32) and widened in-kernel.
        mask_arr = jnp.asarray(mask)
        if mask_arr.dtype.itemsize > 4:
            mask_arr = mask_arr.astype(jnp.float32)
        mask_t = _pad2(jnp.tile(mask_arr, (anchor_count, contrast_count)).T,
                       n_c_pad, n_a_pad)                           # [N_c_pad, N_a_pad]

        kernel = _make_dense_mask_kernel(inv_t, scale, n_anchor, n_contrast, tm, tk)
        loss_rows = pl.pallas_call(
            kernel,
            out_shape=out_shape,
            grid_spec=pltpu.PrefetchScalarGridSpec(
                num_scalar_prefetch=0,
                grid=grid,
                in_specs=[
                    pl.BlockSpec((tk, tm), lambda i, k: (k, i)),  # mask^T block
                    a_spec,
                    c_spec,
                ],
                out_specs=out_spec,
                scratch_shapes=scratch),
            compiler_params=cparams,
        )(mask_t, a_arr, c_arr)

    loss = loss_rows[0, :n_anchor].reshape(anchor_count, bsz)
    if weights is not None:
        return jnp.sum(loss * weights) / jnp.sum(weights)
    return jnp.mean(loss)


def _supcon_loss_ref(features, labels=None, mask=None, weights=None,
                     temperature=0.07, contrast_mode="all", base_temperature=0.07):
    """Pure-JAX reference mirroring the PyTorch code, for correctness checking."""
    bsz, n_views, _ = features.shape
    if labels is None and mask is None:
        mask = jnp.eye(bsz, dtype=jnp.float32)
    elif labels is not None:
        labels = jnp.asarray(labels).reshape(-1, 1)
        mask = (labels == labels.T).astype(jnp.float32)
    else:
        mask = jnp.asarray(mask, dtype=jnp.float32)
    cf = jnp.swapaxes(features, 0, 1).reshape(n_views * bsz, -1).astype(jnp.float32)
    if contrast_mode == "one":
        af, anchor_count = features[:, 0, :].astype(jnp.float32), 1
    else:
        af, anchor_count = cf, n_views
    n_a, n_c = anchor_count * bsz, n_views * bsz
    adc = jnp.dot(af, cf.T, precision=lax.Precision.HIGHEST) / temperature
    logits = adc - jnp.max(adc, axis=1, keepdims=True)
    mask = jnp.tile(mask, (anchor_count, n_views))
    lmask = 1.0 - jnp.eye(n_a, n_c, dtype=jnp.float32)
    mask = mask * lmask
    exp_logits = jnp.exp(logits) * lmask
    log_prob = logits - jnp.log(jnp.sum(exp_logits, axis=1, keepdims=True))
    mlpp = jnp.sum(mask * log_prob, axis=1) / jnp.sum(mask, axis=1)
    loss = (-(temperature / base_temperature) * mlpp).reshape(anchor_count, bsz)
    if weights is not None:
        return jnp.sum(loss * weights) / jnp.sum(weights)
    return jnp.mean(loss)


if __name__ == "__main__":
    key = jax.random.PRNGKey(0)
    bsz, n_views, dim = 8, 2, 32
    kf, kl = jax.random.split(key)

    feats = jax.random.normal(kf, (bsz, n_views, dim), dtype=jnp.float32)
    feats = feats / jnp.linalg.norm(feats, axis=-1, keepdims=True)
    labels = jax.random.randint(kl, (bsz,), 0, 3)

    # Supervised case (labels) — class-id kernel.
    out_sup = jax.block_until_ready(supcon_loss(feats, labels=labels))
    ref_sup = _supcon_loss_ref(feats, labels=labels)
    assert jnp.allclose(out_sup, ref_sup, rtol=1e-4, atol=1e-4), (out_sup, ref_sup)

    # SimCLR / unsupervised case (no labels, eye mask) — same compiled kernel.
    out_uns = jax.block_until_ready(supcon_loss(feats))
    ref_uns = _supcon_loss_ref(feats)
    assert jnp.allclose(out_uns, ref_uns, rtol=1e-4, atol=1e-4), (out_uns, ref_uns)

    # Explicit mask path (dense-mask kernel); eye mask must match unsupervised.
    out_msk = jax.block_until_ready(supcon_loss(feats, mask=jnp.eye(bsz)))
    assert jnp.allclose(out_msk, ref_uns, rtol=1e-4, atol=1e-4), (out_msk, ref_uns)

    # contrast_mode='one'.
    out_one = jax.block_until_ready(
        supcon_loss(feats, labels=labels, contrast_mode="one"))
    ref_one = _supcon_loss_ref(feats, labels=labels, contrast_mode="one")
    assert jnp.allclose(out_one, ref_one, rtol=1e-4, atol=1e-4), (out_one, ref_one)

    # Weights branch (wrapper glue): all-ones weights == plain mean (cache hit).
    w = jnp.ones((n_views, bsz), dtype=jnp.float32)
    out_w = jax.block_until_ready(supcon_loss(feats, labels=labels, weights=w))
    assert jnp.allclose(out_w, out_sup, rtol=1e-4, atol=1e-4), (out_w, out_sup)

    print("KERNEL_OK")
</pallas_src>

<mosaic_0001>
module attributes {stable_mosaic.version = 11 : i64} {
  func.func @kernel(%arg0: i32, %arg1: i32, %arg2: memref<1x128xi32, #tpu.memory_space<vmem>>, %arg3: memref<128x1xi32, #tpu.memory_space<vmem>>, %arg4: memref<128x128xf32, #tpu.memory_space<vmem>>, %arg5: memref<128x128xf32, #tpu.memory_space<vmem>>, %arg6: memref<1x128xf32, #tpu.memory_space<vmem>>, %arg7: memref<1x128xf32, #tpu.memory_space<vmem>>, %arg8: memref<1x128xf32, #tpu.memory_space<vmem>>, %arg9: memref<1x128xf32, #tpu.memory_space<vmem>>, %arg10: memref<1x128xf32, #tpu.memory_space<vmem>>) attributes {dimension_semantics = [#tpu.dimension_semantics<parallel>, #tpu.dimension_semantics<arbitrary>], iteration_bounds = array<i64: 1, 1>, scalar_prefetch = 0 : i64, scratch_operands = 4 : i64, tpu.core_type = #tpu.core_type<tc>, window_params = [{transform_indices = @transform_0, window_bounds = array<i64: 1, 128>}, {transform_indices = @transform_1, window_bounds = array<i64: 128, 1>}, {transform_indices = @transform_2, window_bounds = array<i64: 128, 128>}, {transform_indices = @transform_3, window_bounds = array<i64: 128, 128>}, {transform_indices = @transform_4, window_bounds = array<i64: 1, 128>}]} {
    %c0_i32 = arith.constant 0 : i32
    %0 = arith.cmpi eq, %arg1, %c0_i32 : i32
    %1 = arith.extui %0 : i1 to i32
    %c0_i32_0 = arith.constant 0 : i32
    %2 = arith.cmpi ne, %1, %c0_i32_0 : i32
    scf.if %2 {
      %cst_36 = arith.constant 0xFF800000 : f32
      %65 = vector.broadcast %cst_36 : f32 to vector<1x128xf32>
      %c0_37 = arith.constant 0 : index
      %c0_38 = arith.constant 0 : index
      %66 = vector.load %arg7[%c0_37, %c0_38] : memref<1x128xf32, #tpu.memory_space<vmem>>, vector<1x128xf32>
      tpu.vector_store %arg7[%c0_37, %c0_38], %65 {strides = array<i32>} : memref<1x128xf32, #tpu.memory_space<vmem>>, vector<1x128xf32>,
      %cst_39 = arith.constant 0.000000e+00 : f32
      %67 = vector.broadcast %cst_39 : f32 to vector<1x128xf32>
      %c0_40 = arith.constant 0 : index
      %c0_41 = arith.constant 0 : index
      %68 = vector.load %arg8[%c0_40, %c0_41] : memref<1x128xf32, #tpu.memory_space<vmem>>, vector<1x128xf32>
      tpu.vector_store %arg8[%c0_40, %c0_41], %67 {strides = array<i32>} : memref<1x128xf32, #tpu.memory_space<vmem>>, vector<1x128xf32>,
      %cst_42 = arith.constant 0.000000e+00 : f32
      %69 = vector.broadcast %cst_42 : f32 to vector<1x128xf32>
      %c0_43 = arith.constant 0 : index
      %c0_44 = arith.constant 0 : index
      %70 = vector.load %arg9[%c0_43, %c0_44] : memref<1x128xf32, #tpu.memory_space<vmem>>, vector<1x128xf32>
      tpu.vector_store %arg9[%c0_43, %c0_44], %69 {strides = array<i32>} : memref<1x128xf32, #tpu.memory_space<vmem>>, vector<1x128xf32>,
      %cst_45 = arith.constant 0.000000e+00 : f32
      %71 = vector.broadcast %cst_45 : f32 to vector<1x128xf32>
      %c0_46 = arith.constant 0 : index
      %c0_47 = arith.constant 0 : index
      %72 = vector.load %arg10[%c0_46, %c0_47] : memref<1x128xf32, #tpu.memory_space<vmem>>, vector<1x128xf32>
      tpu.vector_store %arg10[%c0_46, %c0_47], %71 {strides = array<i32>} : memref<1x128xf32, #tpu.memory_space<vmem>>, vector<1x128xf32>,
    } else {
    }
    %c0 = arith.constant 0 : index
    %c0_1 = arith.constant 0 : index
    %3 = vector.load %arg5[%c0, %c0_1] : memref<128x128xf32, #tpu.memory_space<vmem>>, vector<128x128xf32>
    %c0_2 = arith.constant 0 : index
    %c0_3 = arith.constant 0 : index
    %4 = vector.load %arg4[%c0_2, %c0_3] : memref<128x128xf32, #tpu.memory_space<vmem>>, vector<128x128xf32>
    %cst = arith.constant dense<0.000000e+00> : vector<128x128xf32>
    %5 = tpu.matmul %3, %4, %cst {dimension_numbers = #tpu.dot_dimension_numbers<[1], [1], [0], [0], [0, 0, 1, 0], [], []>} : vector<128x128xf32>, vector<128x128xf32>, vector<128x128xf32> -> vector<128x128xf32>
    %cst_4 = arith.constant 14.2857141 : f32
    %6 = vector.broadcast %cst_4 : f32 to vector<128x128xf32>
    %7 = arith.mulf %5, %6 : vector<128x128xf32>
    %c128_i32 = arith.constant 128 : i32
    %8 = arith.muli %arg1, %c128_i32 : i32
    %9 = tpu.iota {dimensions = array<i32: 0>} : vector<128x1xi32>
    %10 = vector.broadcast %8 : i32 to vector<128x1xi32>
    %11 = arith.addi %10, %9 : vector<128x1xi32>
    %c128_i32_5 = arith.constant 128 : i32
    %12 = arith.muli %arg0, %c128_i32_5 : i32
    %13 = tpu.iota {dimensions = array<i32: 1>} : vector<1x128xi32>
    %14 = vector.broadcast %12 : i32 to vector<1x128xi32>
    %15 = arith.addi %14, %13 : vector<1x128xi32>
    %c16_i32 = arith.constant 16 : i32
    %16 = vector.broadcast %c16_i32 : i32 to vector<128x1xi32>
    %17 = arith.cmpi slt, %11, %16 : vector<128x1xi32>
    %18 = vector.broadcast %11 : vector<128x1xi32> to vector<128x128xi32>
    %19 = vector.broadcast %15 : vector<1x128xi32> to vector<128x128xi32>
    %20 = arith.cmpi ne, %18, %19 : vector<128x128xi32>
    %21 = vector.broadcast %17 : vector<128x1xi1> to vector<128x128xi1>
    %22 = arith.andi %21, %20 : vector<128x128xi1>
    %cst_6 = arith.constant dense<0xFF800000> : vector<128xf32>
    %23 = vector.multi_reduction <maximumf>, %7, %cst_6 [0] : vector<128x128xf32> to vector<128xf32>
    %24 = vector.shape_cast %23 : vector<128xf32> to vector<1x128xf32>
    %c0_7 = arith.constant 0 : index
    %c0_8 = arith.constant 0 : index
    %25 = vector.load %arg7[%c0_7, %c0_8] : memref<1x128xf32, #tpu.memory_space<vmem>>, vector<1x128xf32>
    %26 = arith.maximumf %25, %24 : vector<1x128xf32>
    %c0_9 = arith.constant 0 : index
    %c0_10 = arith.constant 0 : index
    %27 = vector.load %arg7[%c0_9, %c0_10] : memref<1x128xf32, #tpu.memory_space<vmem>>, vector<1x128xf32>
    %28 = arith.subf %27, %26 : vector<1x128xf32>
    %29 = math.exp %28 : vector<1x128xf32>
    %30 = vector.broadcast %26 : vector<1x128xf32> to vector<128x128xf32>
    %31 = arith.subf %7, %30 : vector<128x128xf32>
    %32 = math.exp %31 : vector<128x128xf32>
    %cst_11 = arith.constant 0.000000e+00 : f32
    %33 = vector.broadcast %cst_11 : f32 to vector<128x128xf32>
    %34 = arith.select %22, %32, %33 : vector<128x128xi1>, vector<128x128xf32>
    %c0_12 = arith.constant 0 : index
    %c0_13 = arith.constant 0 : index
    %35 = vector.load %arg8[%c0_12, %c0_13] : memref<1x128xf32, #tpu.memory_space<vmem>>, vector<1x128xf32>
    %36 = arith.mulf %29, %35 : vector<1x128xf32>
    %cst_14 = arith.constant dense<0.000000e+00> : vector<128xf32>
    %37 = vector.multi_reduction <add>, %34, %cst_14 [0] : vector<128x128xf32> to vector<128xf32>
    %38 = vector.shape_cast %37 : vector<128xf32> to vector<1x128xf32>
    %39 = arith.addf %36, %38 : vector<1x128xf32>
    %c0_15 = arith.constant 0 : index
    %c0_16 = arith.constant 0 : index
    %40 = vector.load %arg8[%c0_15, %c0_16] : memref<1x128xf32, #tpu.memory_space<vmem>>, vector<1x128xf32>
    tpu.vector_store %arg8[%c0_15, %c0_16], %39 {strides = array<i32>} : memref<1x128xf32, #tpu.memory_space<vmem>>, vector<1x128xf32>,
    %c0_17 = arith.constant 0 : index
    %c0_18 = arith.constant 0 : index
    %41 = vector.load %arg7[%c0_17, %c0_18] : memref<1x128xf32, #tpu.memory_space<vmem>>, vector<1x128xf32>
    tpu.vector_store %arg7[%c0_17, %c0_18], %26 {strides = array<i32>} : memref<1x128xf32, #tpu.memory_space<vmem>>, vector<1x128xf32>,
    %c0_19 = arith.constant 0 : index
    %c0_20 = arith.constant 0 : index
    %42 = vector.load %arg3[%c0_19, %c0_20] : memref<128x1xi32, #tpu.memory_space<vmem>>, vector<128x1xi32>
    %c0_21 = arith.constant 0 : index
    %c0_22 = arith.constant 0 : index
    %43 = vector.load %arg2[%c0_21, %c0_22] : memref<1x128xi32, #tpu.memory_space<vmem>>, vector<1x128xi32>
    %44 = vector.broadcast %42 : vector<128x1xi32> to vector<128x128xi32>
    %45 = vector.broadcast %43 : vector<1x128xi32> to vector<128x128xi32>
    %46 = arith.cmpi eq, %44, %45 : vector<128x128xi32>
    %47 = arith.andi %22, %46 : vector<128x128xi1>
    %c0_23 = arith.constant 0 : index
    %c0_24 = arith.constant 0 : index
    %48 = vector.load %arg9[%c0_23, %c0_24] : memref<1x128xf32, #tpu.memory_space<vmem>>, vector<1x128xf32>
    %cst_25 = arith.constant 0.000000e+00 : f32
    %49 = vector.broadcast %cst_25 : f32 to vector<128x128xf32>
    %50 = arith.select %47, %7, %49 : vector<128x128xi1>, vector<128x128xf32>
    %cst_26 = arith.constant dense<0.000000e+00> : vector<128xf32>
    %51 = vector.multi_reduction <add>, %50, %cst_26 [0] : vector<128x128xf32> to vector<128xf32>
    %52 = vector.shape_cast %51 : vector<128xf32> to vector<1x128xf32>
    %53 = arith.addf %48, %52 : vector<1x128xf32>
    %c0_27 = arith.constant 0 : index
    %c0_28 = arith.constant 0 : index
    %54 = vector.load %arg9[%c0_27, %c0_28] : memref<1x128xf32, #tpu.memory_space<vmem>>, vector<1x128xf32>
    tpu.vector_store %arg9[%c0_27, %c0_28], %53 {strides = array<i32>} : memref<1x128xf32, #tpu.memory_space<vmem>>, vector<1x128xf32>,
    %c0_29 = arith.constant 0 : index
    %c0_30 = arith.constant 0 : index
    %55 = vector.load %arg10[%c0_29, %c0_30] : memref<1x128xf32, #tpu.memory_space<vmem>>, vector<1x128xf32>
    %56 = arith.extui %47 : vector<128x128xi1> to vector<128x128xi32>
    %57 = arith.sitofp %56 : vector<128x128xi32> to vector<128x128xf32>
    %cst_31 = arith.constant dense<0.000000e+00> : vector<128xf32>
    %58 = vector.multi_reduction <add>, %57, %cst_31 [0] : vector<128x128xf32> to vector<128xf32>
    %59 = vector.shape_cast %58 : vector<128xf32> to vector<1x128xf32>
    %60 = arith.addf %55, %59 : vector<1x128xf32>
    %c0_32 = arith.constant 0 : index
    %c0_33 = arith.constant 0 : index
    %61 = vector.load %arg10[%c0_32, %c0_33] : memref<1x128xf32, #tpu.memory_space<vmem>>, vector<1x128xf32>
    tpu.vector_store %arg10[%c0_32, %c0_33], %60 {strides = array<i32>} : memref<1x128xf32, #tpu.memory_space<vmem>>, vector<1x128xf32>,
    %c0_i32_34 = arith.constant 0 : i32
    %62 = arith.cmpi eq, %arg1, %c0_i32_34 : i32
    %63 = arith.extui %62 : i1 to i32
    %c0_i32_35 = arith.constant 0 : i32
    %64 = arith.cmpi ne, %63, %c0_i32_35 : i32
    scf.if %64 {
      %c0_36 = arith.constant 0 : index
      %c0_37 = arith.constant 0 : index
      %65 = vector.load %arg7[%c0_36, %c0_37] : memref<1x128xf32, #tpu.memory_space<vmem>>, vector<1x128xf32>
      %c0_38 = arith.constant 0 : index
      %c0_39 = arith.constant 0 : index
      %66 = vector.load %arg8[%c0_38, %c0_39] : memref<1x128xf32, #tpu.memory_space<vmem>>, vector<1x128xf32>
      %67 = math.log %66 : vector<1x128xf32>
      %68 = arith.addf %65, %67 : vector<1x128xf32>
      %c0_40 = arith.constant 0 : index
      %c0_41 = arith.constant 0 : index
      %69 = vector.load %arg10[%c0_40, %c0_41] : memref<1x128xf32, #tpu.memory_space<vmem>>, vector<1x128xf32>
      %c0_42 = arith.constant 0 : index
      %c0_43 = arith.constant 0 : index
      %70 = vector.load %arg9[%c0_42, %c0_43] : memref<1x128xf32, #tpu.memory_space<vmem>>, vector<1x128xf32>
      %71 = arith.mulf %69, %68 : vector<1x128xf32>
      %72 = arith.subf %70, %71 : vector<1x128xf32>
      %cst_44 = arith.constant -1.000000e+00 : f32
      %73 = vector.broadcast %cst_44 : f32 to vector<1x128xf32>
      %74 = arith.mulf %73, %72 : vector<1x128xf32>
      %75 = arith.divf %74, %69 : vector<1x128xf32>
      %c16_i32_45 = arith.constant 16 : i32
      %76 = vector.broadcast %c16_i32_45 : i32 to vector<1x128xi32>
      %77 = arith.cmpi slt, %15, %76 : vector<1x128xi32>
      %cst_46 = arith.constant 0.000000e+00 : f32
      %78 = vector.broadcast %cst_46 : f32 to vector<1x128xf32>
      %79 = arith.select %77, %75, %78 : vector<1x128xi1>, vector<1x128xf32>
      %c0_47 = arith.constant 0 : index
      %c0_48 = arith.constant 0 : index
      %80 = vector.load %arg6[%c0_47, %c0_48] : memref<1x128xf32, #tpu.memory_space<vmem>>, vector<1x128xf32>
      tpu.vector_store %arg6[%c0_47, %c0_48], %79 {strides = array<i32>} : memref<1x128xf32, #tpu.memory_space<vmem>>, vector<1x128xf32>,
    } else {
    }
    return
  }
  func.func @transform_0(%arg0: i32, %arg1: i32) -> (i32, i32) {
    %c0_i32 = arith.constant 0 : i32
    %c0_i32_0 = arith.constant 0 : i32
    return %c0_i32, %arg0 : i32, i32
  }
  func.func @transform_1(%arg0: i32, %arg1: i32) -> (i32, i32) {
    %c0_i32 = arith.constant 0 : i32
    %c0_i32_0 = arith.constant 0 : i32
    return %arg1, %c0_i32 : i32, i32
  }
  func.func @transform_2(%arg0: i32, %arg1: i32) -> (i32, i32) {
    %c0_i32 = arith.constant 0 : i32
    %c0_i32_0 = arith.constant 0 : i32
    return %arg0, %c0_i32 : i32, i32
  }
  func.func @transform_3(%arg0: i32, %arg1: i32) -> (i32, i32) {
    %c0_i32 = arith.constant 0 : i32
    %c0_i32_0 = arith.constant 0 : i32
    return %arg1, %c0_i32 : i32, i32
  }
  func.func @transform_4(%arg0: i32, %arg1: i32) -> (i32, i32) {
    %c0_i32 = arith.constant 0 : i32
    %c0_i32_0 = arith.constant 0 : i32
    return %c0_i32, %arg0 : i32, i32
  }
}

</mosaic_0001>

<llo_original>
// kernel: tpu_custom_call.1
$region0: #{tpu_custom_call.1}
  #allocation0 [shape = 'u32[]', space=smem, size = 0x4, offset = 0x4, fixed_abs, tag = 'smem constant byte address 0x4 - core index']
  #allocation1 [shape = 'u32[72,128]{1,0:T(1,128)}', space=vmem, size = 0x9000, scoped, tag = 'internal scratch']
  #allocation2 [shape = 'f32[1,128]{1,0:T(1,128)}', space=vmem, size = 0x200, scoped, tag = 'scratch operand']
  #allocation3 [shape = 'f32[1,128]{1,0:T(1,128)}', space=vmem, size = 0x200, scoped, tag = 'scratch operand']
  #allocation4 [shape = 'f32[1,128]{1,0:T(1,128)}', space=vmem, size = 0x200, scoped, tag = 'scratch operand']
  #allocation5 [shape = 'f32[1,128]{1,0:T(1,128)}', space=vmem, size = 0x200, scoped, tag = 'scratch operand']
  %s0 = inlined_call_operand.vmem [shape: s32[1,128], index: 0, kind: input, shape index: {}]
  %s1 = inlined_call_operand.vmem [shape: s32[128,1], index: 1, kind: input, shape index: {}]
  %s2 = inlined_call_operand.vmem [shape: f32[128,128], index: 2, kind: input, shape index: {}]
  %s3 = inlined_call_operand.hbm [shape: f32[128,128], index: 3, kind: input, shape index: {}]
  %s4 = inlined_call_operand.hbm [shape: f32[1,128], index: 4, kind: output, shape index: {}]
  %s5 = sld [smem:[#allocation0]]
  $region38: #{tpu_custom_call.1} parent=0
    _
  %s7 = ssub.s32 1, %s5
  %s8 = scalar_select 0, %s7, %s5
  $region1: #{tpu_custom_call.1} parent=0
    #allocation6 [shape = 'u8[65536]{0}', space=vmem, size = 0x10000, scoped, tag = 'input window, operand 3, single buffered']
    #allocation7 [shape = 's32[1]{0}', space=sflag, size = 0x4, scoped, tag = 'scoped memory for tpu_custom_call.1']
    #allocation8 [shape = 's32[1]{0}', space=sflag, size = 0x4, scoped, tag = 'scoped memory for tpu_custom_call.1']
    #allocation9 [shape = 'u8[512]{0}', space=vmem, size = 0x400, scoped, tag = 'output window, operand 0, single buffered']
    %9 = vsyncpa [#allocation7], 0
    %10 = vsyncpa [#allocation8], 0
    // Predicated region
    $region2: #{tpu_custom_call.1} parent=1 // pred_check
      _
    $region3: #{tpu_custom_call.1} parent=1 // pred_check_branch
      %12 = sbr.rel (0) target = $region5
    $region4: #{tpu_custom_call.1} parent=1 // pred_region
      _
    $region5: #{tpu_custom_call.1} parent=1 // pred_fallthru
      _
    // Predicated region
    $region6: #{tpu_custom_call.1} parent=1 // pred_check
      _
    $region7: #{tpu_custom_call.1} parent=1 // pred_check_branch
      %14 = sbr.rel (0) target = $region9
    $region8: #{tpu_custom_call.1} parent=1 // pred_region
      _
    $region9: #{tpu_custom_call.1} parent=1 // pred_fallthru
      _
    // Predicated region
    $region10: #{tpu_custom_call.1} parent=1 // pred_check
      _
    $region11: #{tpu_custom_call.1} parent=1 // pred_check_branch
      %16 = sbr.rel (0) target = $region13
    $region12: #{tpu_custom_call.1} parent=1 // pred_region
      _
    $region13: #{tpu_custom_call.1} parent=1 // pred_fallthru
      _
    // Predicated region
    $region14: #{tpu_custom_call.1} parent=1 // pred_check
      _
    $region15: #{tpu_custom_call.1} parent=1 // pred_check_branch
      %18 = sbr.rel (0) target = $region17
    $region16: #{tpu_custom_call.1} parent=1 // pred_region
      %20 = vsyncadd [#allocation7], 0
      %s21 = sshll.u32 %s3, 4
      %s22 = int_to_ptr.hbm [resolvable:$true] %s21
      %s23 = sshll.u32 [#allocation6], 4
      %s24 = int_to_ptr.vmem [resolvable:$true] %s23
      %29 = dma.hbm_to_vmem [thread:$0]  %s22, 2048, %s24, [#allocation7], 128, 128, 8
    $region17: #{tpu_custom_call.1} parent=1 // pred_fallthru
      _
    // Predicated region
    $region18: #{tpu_custom_call.1} parent=1 // pred_check
      _
    $region19: #{tpu_custom_call.1} parent=1 // pred_check_branch
      %31 = sbr.rel (0) target = $region21
    $region20: #{tpu_custom_call.1} parent=1 // pred_region
      %33 = dma.done [#allocation7], 2048
    $region21: #{tpu_custom_call.1} parent=1 // pred_fallthru
      _
    %p34 = scmp.eq.s32.totalorder 0, 0
    // Predicated region
    $region22: #{tpu_custom_call.1} parent=1 // pred_check
      %p35 = pneg %p34
    $region23: #{tpu_custom_call.1} parent=1 // pred_check_branch
      %37 = sbr.rel (%p35) target = $region25
    $region24: #{tpu_custom_call.1} parent=1 // pred_region
      %38 = vst [vmem:[#allocation2] sm:$0x1] -inf
      %39 = vst [vmem:[#allocation3] sm:$0x1] 0.0
      %40 = vst [vmem:[#allocation4] sm:$0x1] 0.0
      %41 = vst [vmem:[#allocation5] sm:$0x1] 0.0
    $region25: #{tpu_custom_call.1} parent=1 // pred_fallthru
      _
    %v42 = vld [vmem:[#allocation6] sm:$0xff]
    %v43 = vld [vmem:[#allocation6 + $0x8] sm:$0xff]
    %v44 = vld [vmem:[#allocation6 + $0x10] sm:$0xff]
    %v45 = vld [vmem:[#allocation6 + $0x18] sm:$0xff]
    %v46 = vld [vmem:[#allocation6 + $0x20] sm:$0xff]
    %v47 = vld [vmem:[#allocation6 + $0x28] sm:$0xff]
    %v48 = vld [vmem:[#allocation6 + $0x30] sm:$0xff]
    %v49 = vld [vmem:[#allocation6 + $0x38] sm:$0xff]
    %v50 = vld [vmem:[#allocation6 + $0x40] sm:$0xff]
    %v51 = vld [vmem:[#allocation6 + $0x48] sm:$0xff]
    %v52 = vld [vmem:[#allocation6 + $0x50] sm:$0xff]
    %v53 = vld [vmem:[#allocation6 + $0x58] sm:$0xff]
    %v54 = vld [vmem:[#allocation6 + $0x60] sm:$0xff]
    %v55 = vld [vmem:[#allocation6 + $0x68] sm:$0xff]
    %v56 = vld [vmem:[#allocation6 + $0x70] sm:$0xff]
    %v57 = vld [vmem:[#allocation6 + $0x78] sm:$0xff]
    %v58 = vld [vmem:[%s2] sm:$0xff]
    %v59 = vld [vmem:[%s2 + $0x8] sm:$0xff]
    %v60 = vld [vmem:[%s2 + $0x10] sm:$0xff]
    %v61 = vld [vmem:[%s2 + $0x18] sm:$0xff]
    %v62 = vld [vmem:[%s2 + $0x20] sm:$0xff]
    %v63 = vld [vmem:[%s2 + $0x28] sm:$0xff]
    %v64 = vld [vmem:[%s2 + $0x30] sm:$0xff]
    %v65 = vld [vmem:[%s2 + $0x38] sm:$0xff]
    %v66 = vld [vmem:[%s2 + $0x40] sm:$0xff]
    %v67 = vld [vmem:[%s2 + $0x48] sm:$0xff]
    %v68 = vld [vmem:[%s2 + $0x50] sm:$0xff]
    %v69 = vld [vmem:[%s2 + $0x58] sm:$0xff]
    %v70 = vld [vmem:[%s2 + $0x60] sm:$0xff]
    %v71 = vld [vmem:[%s2 + $0x68] sm:$0xff]
    %v72 = vld [vmem:[%s2 + $0x70] sm:$0xff]
    %v73 = vld [vmem:[%s2 + $0x78] sm:$0xff]
    %74 = vmatpush.xpose.msra.mxu0 %v73
    %75 = vmatpush.xpose.msra.mxu0 %v72
    %76 = vmatpush.xpose.msra.mxu0 %v71
    %77 = vmatpush.xpose.msra.mxu0 %v70
    %78 = vmatpush.xpose.msra.mxu0 %v69
    %79 = vmatpush.xpose.msra.mxu0 %v68
    %80 = vmatpush.xpose.msra.mxu0 %v67
    %81 = vmatpush.xpose.msra.mxu0 %v66
    %82 = vmatpush.xpose.msra.mxu0 %v65
    %83 = vmatpush.xpose.msra.mxu0 %v64
    %84 = vmatpush.xpose.msra.mxu0 %v63
    %85 = vmatpush.xpose.msra.mxu0 %v62
    %86 = vmatpush.xpose.msra.mxu0 %v61
    %87 = vmatpush.xpose.msra.mxu0 %v60
    %88 = vmatpush.xpose.msra.mxu0 %v59
    %89 = vmatpush.xpose.msra.mxu0 %v58
    %90 = vmatmul.f32.gmra.mxu0 %v42
    %v91 = vpop.f32.mrf.mxu0
    %v92 = vadd.f32 0.0, %v91
    %93 = vmatmul.f32.gmra.mxu0 %v43
    %v94 = vpop.f32.mrf.mxu0
    %v95 = vadd.f32 0.0, %v94
    %96 = vmatmul.f32.gmra.mxu0 %v44
    %v97 = vpop.f32.mrf.mxu0
    %v98 = vadd.f32 0.0, %v97
    %99 = vmatmul.f32.gmra.mxu0 %v45
    %v100 = vpop.f32.mrf.mxu0
    %v101 = vadd.f32 0.0, %v100
    %102 = vmatmul.f32.gmra.mxu0 %v46
    %v103 = vpop.f32.mrf.mxu0
    %v104 = vadd.f32 0.0, %v103
    %105 = vmatmul.f32.gmra.mxu0 %v47
    %v106 = vpop.f32.mrf.mxu0
    %v107 = vadd.f32 0.0, %v106
    %108 = vmatmul.f32.gmra.mxu0 %v48
    %v109 = vpop.f32.mrf.mxu0
    %v110 = vadd.f32 0.0, %v109
    %111 = vmatmul.f32.gmra.mxu0 %v49
    %v112 = vpop.f32.mrf.mxu0
    %v113 = vadd.f32 0.0, %v112
    %114 = vmatmul.f32.gmra.mxu0 %v50
    %v115 = vpop.f32.mrf.mxu0
    %v116 = vadd.f32 0.0, %v115
    %117 = vmatmul.f32.gmra.mxu0 %v51
    %v118 = vpop.f32.mrf.mxu0
    %v119 = vadd.f32 0.0, %v118
    %120 = vmatmul.f32.gmra.mxu0 %v52
    %v121 = vpop.f32.mrf.mxu0
    %v122 = vadd.f32 0.0, %v121
    %123 = vmatmul.f32.gmra.mxu0 %v53
    %v124 = vpop.f32.mrf.mxu0
    %v125 = vadd.f32 0.0, %v124
    %126 = vmatmul.f32.gmra.mxu0 %v54
    %v127 = vpop.f32.mrf.mxu0
    %v128 = vadd.f32 0.0, %v127
    %129 = vmatmul.f32.gmra.mxu0 %v55
    %v130 = vpop.f32.mrf.mxu0
    %v131 = vadd.f32 0.0, %v130
    %132 = vmatmul.f32.gmra.mxu0 %v56
    %v133 = vpop.f32.mrf.mxu0
    %v134 = vadd.f32 0.0, %v133
    %135 = vmatmul.f32.gmra.mxu0 %v57
    %v136 = vpop.f32.mrf.mxu0
    %v137 = vadd.f32 0.0, %v136
    %138 = vdwg.mxu0
    %v139 = vmul.f32 %v92, 14.285714
    %v140 = vmul.f32 %v95, 14.285714
    %v141 = vmul.f32 %v98, 14.285714
    %v142 = vmul.f32 %v101, 14.285714
    %v143 = vmul.f32 %v104, 14.285714
    %v144 = vmul.f32 %v107, 14.285714
    %v145 = vmul.f32 %v110, 14.285714
    %v146 = vmul.f32 %v113, 14.285714
    %v147 = vmul.f32 %v116, 14.285714
    %v148 = vmul.f32 %v119, 14.285714
    %v149 = vmul.f32 %v122, 14.285714
    %v150 = vmul.f32 %v125, 14.285714
    %v151 = vmul.f32 %v128, 14.285714
    %v152 = vmul.f32 %v131, 14.285714
    %v153 = vmul.f32 %v134, 14.285714
    %v154 = vmul.f32 %v137, 14.285714
    %s155 = smul.u32 0, 128
    %v156 = vlaneseq
    %v157 = vshrl.u32 %v156, 7
    %v158 = vadd.s32 %v157, 8
    %v159 = vadd.s32 %v157, 16
    %v160 = vadd.s32 %v157, 24
    %v161 = vadd.s32 %v157, 32
    %v162 = vadd.s32 %v157, 40
    %v163 = vadd.s32 %v157, 48
    %v164 = vadd.s32 %v157, 56
    %v165 = vadd.s32 %v157, 64
    %v166 = vadd.s32 %v157, 72
    %v167 = vadd.s32 %v157, 80
    %v168 = vadd.s32 %v157, 88
    %v169 = vadd.s32 %v157, 96
    %v170 = vadd.s32 %v157, 104
    %v171 = vadd.s32 %v157, 112
    %v172 = vadd.s32 %v157, 120
    %v173 = vstv %s155
    %v174 = vadd.s32 %v173, %v157
    %v175 = vadd.s32 %v173, %v158
    %v176 = vadd.s32 %v173, %v159
    %v177 = vadd.s32 %v173, %v160
    %v178 = vadd.s32 %v173, %v161
    %v179 = vadd.s32 %v173, %v162
    %v180 = vadd.s32 %v173, %v163
    %v181 = vadd.s32 %v173, %v164
    %v182 = vadd.s32 %v173, %v165
    %v183 = vadd.s32 %v173, %v166
    %v184 = vadd.s32 %v173, %v167
    %v185 = vadd.s32 %v173, %v168
    %v186 = vadd.s32 %v173, %v169
    %v187 = vadd.s32 %v173, %v170
    %v188 = vadd.s32 %v173, %v171
    %v189 = vadd.s32 %v173, %v172
    %s190 = smul.u32 0, 128
    %v191 = vlaneseq
    %v192 = vand.u32 %v191, 127
    %v193 = vstv %s190
    %v194 = vadd.s32 %v193, %v192
    %vm195 = vcmp.lt.s32.totalorder %v174, 16
    %vm196 = vcmp.lt.s32.totalorder %v175, 16
    %vm197 = vcmp.lt.s32.totalorder %v176, 16
    %vm198 = vcmp.lt.s32.totalorder %v177, 16
    %vm199 = vcmp.lt.s32.totalorder %v178, 16
    %vm200 = vcmp.lt.s32.totalorder %v179, 16
    %vm201 = vcmp.lt.s32.totalorder %v180, 16
    %vm202 = vcmp.lt.s32.totalorder %v181, 16
    %vm203 = vcmp.lt.s32.totalorder %v182, 16
    %vm204 = vcmp.lt.s32.totalorder %v183, 16
    %vm205 = vcmp.lt.s32.totalorder %v184, 16
    %vm206 = vcmp.lt.s32.totalorder %v185, 16
    %vm207 = vcmp.lt.s32.totalorder %v186, 16
    %vm208 = vcmp.lt.s32.totalorder %v187, 16
    %vm209 = vcmp.lt.s32.totalorder %v188, 16
    %vm210 = vcmp.lt.s32.totalorder %v189, 16
    %vm211 = vcmp.ne.s32.totalorder %v174, %v194
    %vm212 = vcmp.ne.s32.totalorder %v175, %v194
    %vm213 = vcmp.ne.s32.totalorder %v176, %v194
    %vm214 = vcmp.ne.s32.totalorder %v177, %v194
    %vm215 = vcmp.ne.s32.totalorder %v178, %v194
    %vm216 = vcmp.ne.s32.totalorder %v179, %v194
    %vm217 = vcmp.ne.s32.totalorder %v180, %v194
    %vm218 = vcmp.ne.s32.totalorder %v181, %v194
    %vm219 = vcmp.ne.s32.totalorder %v182, %v194
    %vm220 = vcmp.ne.s32.totalorder %v183, %v194
    %vm221 = vcmp.ne.s32.totalorder %v184, %v194
    %vm222 = vcmp.ne.s32.totalorder %v185, %v194
    %vm223 = vcmp.ne.s32.totalorder %v186, %v194
    %vm224 = vcmp.ne.s32.totalorder %v187, %v194
    %vm225 = vcmp.ne.s32.totalorder %v188, %v194
    %vm226 = vcmp.ne.s32.totalorder %v189, %v194
    %v227 = vsel %vm195, 1, 0
    %v228 = vsel %vm196, 1, 0
    %v229 = vsel %vm197, 1, 0
    %v230 = vsel %vm198, 1, 0
    %v231 = vsel %vm199, 1, 0
    %v232 = vsel %vm200, 1, 0
    %v233 = vsel %vm201, 1, 0
    %v234 = vsel %vm202, 1, 0
    %v235 = vsel %vm203, 1, 0
    %v236 = vsel %vm204, 1, 0
    %v237 = vsel %vm205, 1, 0
    %v238 = vsel %vm206, 1, 0
    %v239 = vsel %vm207, 1, 0
    %v240 = vsel %vm208, 1, 0
    %v241 = vsel %vm209, 1, 0
    %v242 = vsel %vm210, 1, 0
    %vm243 = vcmp.eq.s32.totalorder %v227, 1
    %vm244 = vcmp.eq.s32.totalorder %v228, 1
    %vm245 = vcmp.eq.s32.totalorder %v229, 1
    %vm246 = vcmp.eq.s32.totalorder %v230, 1
    %vm247 = vcmp.eq.s32.totalorder %v231, 1
    %vm248 = vcmp.eq.s32.totalorder %v232, 1
    %vm249 = vcmp.eq.s32.totalorder %v233, 1
    %vm250 = vcmp.eq.s32.totalorder %v234, 1
    %vm251 = vcmp.eq.s32.totalorder %v235, 1
    %vm252 = vcmp.eq.s32.totalorder %v236, 1
    %vm253 = vcmp.eq.s32.totalorder %v237, 1
    %vm254 = vcmp.eq.s32.totalorder %v238, 1
    %vm255 = vcmp.eq.s32.totalorder %v239, 1
    %vm256 = vcmp.eq.s32.totalorder %v240, 1
    %vm257 = vcmp.eq.s32.totalorder %v241, 1
    %vm258 = vcmp.eq.s32.totalorder %v242, 1
    %vm259 = vmand %vm243, %vm211
    %vm260 = vmand %vm244, %vm212
    %vm261 = vmand %vm245, %vm213
    %vm262 = vmand %vm246, %vm214
    %vm263 = vmand %vm247, %vm215
    %vm264 = vmand %vm248, %vm216
    %vm265 = vmand %vm249, %vm217
    %vm266 = vmand %vm250, %vm218
    %vm267 = vmand %vm251, %vm219
    %vm268 = vmand %vm252, %vm220
    %vm269 = vmand %vm253, %vm221
    %vm270 = vmand %vm254, %vm222
    %vm271 = vmand %vm255, %vm223
    %vm272 = vmand %vm256, %vm224
    %vm273 = vmand %vm257, %vm225
    %vm274 = vmand %vm258, %vm226
    %v275 = vmax.f32 %v139, %v143
    %v276 = vmax.f32 %v140, %v144
    %v277 = vmax.f32 %v141, %v145
    %v278 = vmax.f32 %v142, %v146
    %v279 = vmax.f32 %v275, %v147
    %v280 = vmax.f32 %v276, %v148
    %v281 = vmax.f32 %v277, %v149
    %v282 = vmax.f32 %v278, %v150
    %v283 = vmax.f32 %v279, %v151
    %v284 = vmax.f32 %v280, %v152
    %v285 = vmax.f32 %v281, %v153
    %v286 = vmax.f32 %v282, %v154
    %v287 = vmax.f32 %v283, %v284
    %v288 = vmax.f32 %v285, %v286
    %v289 = vmax.f32 %v287, %v288
    %v290 = vrot.slane %v289, 4
    %v291 = vmax.f32 %v289, %v290
    %v292 = vrot.slane %v291, 2
    %v293 = vmax.f32 %v291, %v292
    %v294 = vrot.slane %v293, 1
    %v295 = vmax.f32 %v293, %v294
    %v296 = vld [vmem:[#allocation2] sm:$0x1]
    %v297 = vmax.f32 %v296, %v295
    %v298 = vsub.f32 %v296, %v297
    %v299 = vmul.f32 %v298, 1.442695
    %v300 = vpow.pop %v299
    %v302 = vperm.slane %v297, 0
    %v304 = vsub.f32 %v139, %v302
    %v305 = vsub.f32 %v140, %v302
    %v306 = vsub.f32 %v141, %v302
    %v307 = vsub.f32 %v142, %v302
    %v308 = vsub.f32 %v143, %v302
    %v309 = vsub.f32 %v144, %v302
    %v310 = vsub.f32 %v145, %v302
    %v311 = vsub.f32 %v146, %v302
    %v312 = vsub.f32 %v147, %v302
    %v313 = vsub.f32 %v148, %v302
    %v314 = vsub.f32 %v149, %v302
    %v315 = vsub.f32 %v150, %v302
    %v316 = vsub.f32 %v151, %v302
    %v317 = vsub.f32 %v152, %v302
    %v318 = vsub.f32 %v153, %v302
    %v319 = vsub.f32 %v154, %v302
    %v320 = vmul.f32 %v304, 1.442695
    %v321 = vpow.pop %v320
    %v322 = vmul.f32 %v305, 1.442695
    %v323 = vpow.pop %v322
    %v324 = vmul.f32 %v306, 1.442695
    %v325 = vpow.pop %v324
    %v326 = vmul.f32 %v307, 1.442695
    %v327 = vpow.pop %v326
    %v328 = vmul.f32 %v308, 1.442695
    %v329 = vpow.pop %v328
    %v330 = vmul.f32 %v309, 1.442695
    %v331 = vpow.pop %v330
    %v332 = vmul.f32 %v310, 1.442695
    %v333 = vpow.pop %v332
    %v334 = vmul.f32 %v311, 1.442695
    %v335 = vpow.pop %v334
    %v336 = vmul.f32 %v312, 1.442695
    %v337 = vpow.pop %v336
    %v338 = vmul.f32 %v313, 1.442695
    %v339 = vpow.pop %v338
    %v340 = vmul.f32 %v314, 1.442695
    %v341 = vpow.pop %v340
    %v342 = vmul.f32 %v315, 1.442695
    %v343 = vpow.pop %v342
    %v344 = vmul.f32 %v316, 1.442695
    %v345 = vpow.pop %v344
    %v346 = vmul.f32 %v317, 1.442695
    %v347 = vpow.pop %v346
    %v348 = vmul.f32 %v318, 1.442695
    %v349 = vpow.pop %v348
    %v350 = vmul.f32 %v319, 1.442695
    %v351 = vpow.pop %v350
    %v352 = vsel %vm259, %v321, 0.0
    %v353 = vsel %vm260, %v323, 0.0
    %v354 = vsel %vm261, %v325, 0.0
    %v355 = vsel %vm262, %v327, 0.0
    %v356 = vsel %vm263, %v329, 0.0
    %v357 = vsel %vm264, %v331, 0.0
    %v358 = vsel %vm265, %v333, 0.0
    %v359 = vsel %vm266, %v335, 0.0
    %v360 = vsel %vm267, %v337, 0.0
    %v361 = vsel %vm268, %v339, 0.0
    %v362 = vsel %vm269, %v341, 0.0
    %v363 = vsel %vm270, %v343, 0.0
    %v364 = vsel %vm271, %v345, 0.0
    %v365 = vsel %vm272, %v347, 0.0
    %v366 = vsel %vm273, %v349, 0.0
    %v367 = vsel %vm274, %v351, 0.0
    %v368 = vld [vmem:[#allocation3] sm:$0x1]
    %v369 = vmul.f32 %v300, %v368
    %v370 = vadd.f32 %v352, %v353
    %v371 = vadd.f32 %v370, %v354
    %v372 = vadd.f32 %v371, %v355
    %v373 = vadd.f32 %v372, %v356
    %v374 = vadd.f32 %v373, %v357
    %v375 = vadd.f32 %v374, %v358
    %v376 = vadd.f32 %v375, %v359
    %v377 = vadd.f32 %v376, %v360
    %v378 = vadd.f32 %v377, %v361
    %v379 = vadd.f32 %v378, %v362
    %v380 = vadd.f32 %v379, %v363
    %v381 = vadd.f32 %v380, %v364
    %v382 = vadd.f32 %v381, %v365
    %v383 = vadd.f32 %v382, %v366
    %v384 = vadd.f32 %v383, %v367
    %v385 = vrot.slane %v384, 4
    %v386 = vadd.f32 %v384, %v385
    %v387 = vrot.slane %v386, 2
    %v388 = vadd.f32 %v386, %v387
    %v389 = vrot.slane %v388, 1
    %v390 = vadd.f32 %v388, %v389
    %v391 = vadd.f32 %v369, %v390
    %392 = vst [vmem:[#allocation3] sm:$0x1] %v391
    %393 = vst [vmem:[#allocation2] sm:$0x1] %v297
    %v394 = vld [vmem:[%s1] sm:$0xff]
    %v395 = vld [vmem:[%s1 + $0x8] sm:$0xff]
    %v396 = vld [vmem:[%s1 + $0x10] sm:$0xff]
    %v397 = vld [vmem:[%s1 + $0x18] sm:$0xff]
    %v398 = vld [vmem:[%s1 + $0x20] sm:$0xff]
    %v399 = vld [vmem:[%s1 + $0x28] sm:$0xff]
    %v400 = vld [vmem:[%s1 + $0x30] sm:$0xff]
    %v401 = vld [vmem:[%s1 + $0x38] sm:$0xff]
    %v402 = vld [vmem:[%s1 + $0x40] sm:$0xff]
    %v403 = vld [vmem:[%s1 + $0x48] sm:$0xff]
    %v404 = vld [vmem:[%s1 + $0x50] sm:$0xff]
    %v405 = vld [vmem:[%s1 + $0x58] sm:$0xff]
    %v406 = vld [vmem:[%s1 + $0x60] sm:$0xff]
    %v407 = vld [vmem:[%s1 + $0x68] sm:$0xff]
    %v408 = vld [vmem:[%s1 + $0x70] sm:$0xff]
    %v409 = vld [vmem:[%s1 + $0x78] sm:$0xff]
    %v410 = vld [vmem:[%s0] sm:$0x1]
    %411 = vset.pattern.permute.xlu0 0
    %412 = vperm.xlu0 %411, %v394
    %v413 = vpop.permute.xlu0 %412
    %414 = vset.pattern.permute.xlu0 0
    %415 = vperm.xlu0 %414, %v395
    %v416 = vpop.permute.xlu0 %415
    %417 = vset.pattern.permute.xlu0 0
    %418 = vperm.xlu0 %417, %v396
    %v419 = vpop.permute.xlu0 %418
    %420 = vset.pattern.permute.xlu0 0
    %421 = vperm.xlu0 %420, %v397
    %v422 = vpop.permute.xlu0 %421
    %423 = vset.pattern.permute.xlu0 0
    %424 = vperm.xlu0 %423, %v398
    %v425 = vpop.permute.xlu0 %424
    %426 = vset.pattern.permute.xlu0 0
    %427 = vperm.xlu0 %426, %v399
    %v428 = vpop.permute.xlu0 %427
    %429 = vset.pattern.permute.xlu0 0
    %430 = vperm.xlu0 %429, %v400
    %v431 = vpop.permute.xlu0 %430
    %432 = vset.pattern.permute.xlu0 0
    %433 = vperm.xlu0 %432, %v401
    %v434 = vpop.permute.xlu0 %433
    %435 = vset.pattern.permute.xlu0 0
    %436 = vperm.xlu0 %435, %v402
    %v437 = vpop.permute.xlu0 %436
    %438 = vset.pattern.permute.xlu0 0
    %439 = vperm.xlu0 %438, %v403
    %v440 = vpop.permute.xlu0 %439
    %441 = vset.pattern.permute.xlu0 0
    %442 = vperm.xlu0 %441, %v404
    %v443 = vpop.permute.xlu0 %442
    %444 = vset.pattern.permute.xlu0 0
    %445 = vperm.xlu0 %444, %v405
    %v446 = vpop.permute.xlu0 %445
    %447 = vset.pattern.permute.xlu0 0
    %448 = vperm.xlu0 %447, %v406
    %v449 = vpop.permute.xlu0 %448
    %450 = vset.pattern.permute.xlu0 0
    %451 = vperm.xlu0 %450, %v407
    %v452 = vpop.permute.xlu0 %451
    %453 = vset.pattern.permute.xlu0 0
    %454 = vperm.xlu0 %453, %v408
    %v455 = vpop.permute.xlu0 %454
    %456 = vset.pattern.permute.xlu0 0
    %457 = vperm.xlu0 %456, %v409
    %v458 = vpop.permute.xlu0 %457
    %v459 = vperm.slane %v410, 0
    %vm460 = vcmp.eq.s32.totalorder %v413, %v459
    %vm461 = vcmp.eq.s32.totalorder %v416, %v459
    %vm462 = vcmp.eq.s32.totalorder %v419, %v459
    %vm463 = vcmp.eq.s32.totalorder %v422, %v459
    %vm464 = vcmp.eq.s32.totalorder %v425, %v459
    %vm465 = vcmp.eq.s32.totalorder %v428, %v459
    %vm466 = vcmp.eq.s32.totalorder %v431, %v459
    %vm467 = vcmp.eq.s32.totalorder %v434, %v459
    %vm468 = vcmp.eq.s32.totalorder %v437, %v459
    %vm469 = vcmp.eq.s32.totalorder %v440, %v459
    %vm470 = vcmp.eq.s32.totalorder %v443, %v459
    %vm471 = vcmp.eq.s32.totalorder %v446, %v459
    %vm472 = vcmp.eq.s32.totalorder %v449, %v459
    %vm473 = vcmp.eq.s32.totalorder %v452, %v459
    %vm474 = vcmp.eq.s32.totalorder %v455, %v459
    %vm475 = vcmp.eq.s32.totalorder %v458, %v459
    %vm476 = vmand %vm259, %vm460
    %vm477 = vmand %vm260, %vm461
    %vm478 = vmand %vm261, %vm462
    %vm479 = vmand %vm262, %vm463
    %vm480 = vmand %vm263, %vm464
    %vm481 = vmand %vm264, %vm465
    %vm482 = vmand %vm265, %vm466
    %vm483 = vmand %vm266, %vm467
    %vm484 = vmand %vm267, %vm468
    %vm485 = vmand %vm268, %vm469
    %vm486 = vmand %vm269, %vm470
    %vm487 = vmand %vm270, %vm471
    %vm488 = vmand %vm271, %vm472
    %vm489 = vmand %vm272, %vm473
    %vm490 = vmand %vm273, %vm474
    %vm491 = vmand %vm274, %vm475
    %v492 = vld [vmem:[#allocation4] sm:$0x1]
    %v493 = vsel %vm476, %v139, 0.0
    %v494 = vsel %vm477, %v140, 0.0
    %v495 = vsel %vm478, %v141, 0.0
    %v496 = vsel %vm479, %v142, 0.0
    %v497 = vsel %vm480, %v143, 0.0
    %v498 = vsel %vm481, %v144, 0.0
    %v499 = vsel %vm482, %v145, 0.0
    %v500 = vsel %vm483, %v146, 0.0
    %v501 = vsel %vm484, %v147, 0.0
    %v502 = vsel %vm485, %v148, 0.0
    %v503 = vsel %vm486, %v149, 0.0
    %v504 = vsel %vm487, %v150, 0.0
    %v505 = vsel %vm488, %v151, 0.0
    %v506 = vsel %vm489, %v152, 0.0
    %v507 = vsel %vm490, %v153, 0.0
    %v508 = vsel %vm491, %v154, 0.0
    %v509 = vadd.f32 %v493, %v494
    %v510 = vadd.f32 %v509, %v495
    %v511 = vadd.f32 %v510, %v496
    %v512 = vadd.f32 %v511, %v497
    %v513 = vadd.f32 %v512, %v498
    %v514 = vadd.f32 %v513, %v499
    %v515 = vadd.f32 %v514, %v500
    %v516 = vadd.f32 %v515, %v501
    %v517 = vadd.f32 %v516, %v502
    %v518 = vadd.f32 %v517, %v503
    %v519 = vadd.f32 %v518, %v504
    %v520 = vadd.f32 %v519, %v505
    %v521 = vadd.f32 %v520, %v506
    %v522 = vadd.f32 %v521, %v507
    %v523 = vadd.f32 %v522, %v508
    %v524 = vrot.slane %v523, 4
    %v525 = vadd.f32 %v523, %v524
    %v526 = vrot.slane %v525, 2
    %v527 = vadd.f32 %v525, %v526
    %v528 = vrot.slane %v527, 1
    %v529 = vadd.f32 %v527, %v528
    %v530 = vadd.f32 %v492, %v529
    %531 = vst [vmem:[#allocation4] sm:$0x1] %v530
    %v532 = vld [vmem:[#allocation5] sm:$0x1]
    %v533 = vsel %vm476, 1, 0
    %v534 = vsel %vm477, 1, 0
    %v535 = vsel %vm478, 1, 0
    %v536 = vsel %vm479, 1, 0
    %v537 = vsel %vm480, 1, 0
    %v538 = vsel %vm481, 1, 0
    %v539 = vsel %vm482, 1, 0
    %v540 = vsel %vm483, 1, 0
    %v541 = vsel %vm484, 1, 0
    %v542 = vsel %vm485, 1, 0
    %v543 = vsel %vm486, 1, 0
    %v544 = vsel %vm487, 1, 0
    %v545 = vsel %vm488, 1, 0
    %v546 = vsel %vm489, 1, 0
    %v547 = vsel %vm490, 1, 0
    %v548 = vsel %vm491, 1, 0
    %v549 = vcvt.s32.f32 %v533
    %v550 = vcvt.s32.f32 %v534
    %v551 = vcvt.s32.f32 %v535
    %v552 = vcvt.s32.f32 %v536
    %v553 = vcvt.s32.f32 %v537
    %v554 = vcvt.s32.f32 %v538
    %v555 = vcvt.s32.f32 %v539
    %v556 = vcvt.s32.f32 %v540
    %v557 = vcvt.s32.f32 %v541
    %v558 = vcvt.s32.f32 %v542
    %v559 = vcvt.s32.f32 %v543
    %v560 = vcvt.s32.f32 %v544
    %v561 = vcvt.s32.f32 %v545
    %v562 = vcvt.s32.f32 %v546
    %v563 = vcvt.s32.f32 %v547
    %v564 = vcvt.s32.f32 %v548
    %v565 = vadd.f32 %v549, %v550
    %v566 = vadd.f32 %v565, %v551
    %v567 = vadd.f32 %v566, %v552
    %v568 = vadd.f32 %v567, %v553
    %v569 = vadd.f32 %v568, %v554
    %v570 = vadd.f32 %v569, %v555
    %v571 = vadd.f32 %v570, %v556
    %v572 = vadd.f32 %v571, %v557
    %v573 = vadd.f32 %v572, %v558
    %v574 = vadd.f32 %v573, %v559
    %v575 = vadd.f32 %v574, %v560
    %v576 = vadd.f32 %v575, %v561
    %v577 = vadd.f32 %v576, %v562
    %v578 = vadd.f32 %v577, %v563
    %v579 = vadd.f32 %v578, %v564
    %v580 = vrot.slane %v579, 4
    %v581 = vadd.f32 %v579, %v580
    %v582 = vrot.slane %v581, 2
    %v583 = vadd.f32 %v581, %v582
    %v584 = vrot.slane %v583, 1
    %v585 = vadd.f32 %v583, %v584
    %v586 = vadd.f32 %v532, %v585
    %587 = vst [vmem:[#allocation5] sm:$0x1] %v586
    // Predicated region
    $region26: #{tpu_custom_call.1} parent=1 // pred_check
      %p588 = pneg %p34
    $region27: #{tpu_custom_call.1} parent=1 // pred_check_branch
      %590 = sbr.rel (%p588) target = $region29
    $region28: #{tpu_custom_call.1} parent=1 // pred_region
      %v591 = vld [vmem:[#allocation2] sm:$0x1]
      %v592 = vld [vmem:[#allocation3] sm:$0x1]
      %v593 = vlog2.pop %v592
      %v594 = vmul.f32 %v593, 0.6931472
      %v595 = vadd.f32 %v591, %v594
      %v596 = vld [vmem:[#allocation5] sm:$0x1]
      %v597 = vld [vmem:[#allocation4] sm:$0x1]
      %v598 = vmul.f32 %v596, %v595
      %v599 = vsub.f32 %v597, %v598
      %v600 = vmul.f32 %v599, -1.0
      %v601 = vrcp.pop %v596
      %v602 = vmul.f32 %v596, %v601
      %v603 = vsub.f32 1.0, %v602
      %v604 = vmul.f32 %v601, %v603
      %v605 = vadd.f32 %v601, %v604
      %vm606 = vweird.f32 %v596
      %vm607 = vweird.f32 %v601
      %vm608 = vmor %vm606, %vm607
      %v609 = vsel %vm608, %v601, %v605
      %v610 = vand.u32 2147483647, %v596
      %vm611 = vcmp.eq.f32.partialorder %v610, 8.507059e+37
      %v612 = vand.u32 %v596, 2147483648
      %v613 = vor.u32 1.1754944e-38, %v612
      %v614 = vsel %vm611, %v613, %v609
      %v615 = vmul.f32 %v600, %v614
      %vm616 = vcmp.lt.s32.totalorder %v194, 16
      %v617 = vsel %vm616, %v615, 0.0
      %618 = vst [vmem:[#allocation9] sm:$0x1] %v617
    $region29: #{tpu_custom_call.1} parent=1 // pred_fallthru
      _
    // Predicated region
    $region30: #{tpu_custom_call.1} parent=1 // pred_check
      _
    $region31: #{tpu_custom_call.1} parent=1 // pred_check_branch
      %620 = sbr.rel (0) target = $region33
    $region32: #{tpu_custom_call.1} parent=1 // pred_region
      %622 = vsyncadd [#allocation8], 0
      %s624 = sshll.u32 [#allocation9], 4
      %s625 = int_to_ptr.vmem [resolvable:$true] %s624
      %s626 = sshll.u32 %s4, 4
      %s627 = int_to_ptr.hbm [resolvable:$true] %s626
      %629 = dma.vmem_to_hbm [thread:$0]  %s625, 16, %s627, [#allocation8]
    $region33: #{tpu_custom_call.1} parent=1 // pred_fallthru
      _
    // Predicated region
    $region34: #{tpu_custom_call.1} parent=1 // pred_check
      _
    $region35: #{tpu_custom_call.1} parent=1 // pred_check_branch
      %631 = sbr.rel (0) target = $region37
    $region36: #{tpu_custom_call.1} parent=1 // pred_region
      %633 = dma.done [#allocation8], 16
    $region37: #{tpu_custom_call.1} parent=1 // pred_fallthru
      _
    %634 = vsyncpa [#allocation7], 1
    %635 = vsyncpa [#allocation8], 1

</llo_original>
